<compile_context>
chip_gen: v7x
topology: tpu7x:2x2x1
jax: 0.10.0
libtpu: 0.0.40
codegen_flags: <defaults>
</compile_context>

<pallas_src>
import functools
import math

import jax
import jax.numpy as jnp
from jax.experimental import pallas as pl
from jax.experimental.pallas import tpu as pltpu

GAMMA = 2.0


def _round_up(x, m):
    return ((x + m - 1) // m) * m


def _focal_loss_kernel(logit_ref, target_ref, out_ref, acc_ref, *,
                       gamma, tm, tc, rows, cols, need_mask):
    i = pl.program_id(0)          # row-tile index ("parallel")
    j = pl.program_id(1)          # class-tile index ("arbitrary", reduction)

    @pl.when(j == 0)
    def _():
        acc_ref[...] = jnp.zeros_like(acc_ref)

    x = logit_ref[...].astype(jnp.float32)
    t = target_ref[...].astype(jnp.float32)

    # s = x*(2t-1); for binary {0,1} targets |s| == |x|, so a single exp/log
    # feeds both the stable BCE-with-logits and the log-sigmoid focal term.
    # TODO(synk): soft (non-binary) targets would need a separate exp(-|s|).
    s = x * (t * 2.0 - 1.0)
    e = jnp.exp(-jnp.abs(x))                   # == exp(-|s|) for binary t
    log1pe = jnp.log(1.0 + e)
    # Stable BCE-with-logits: x - x*t + softplus(-x)  (exact for any t)
    bce = x - x * t + jnp.maximum(-x, 0.0) + log1pe
    # Focal modulation exp(gamma * logsigmoid(-s)):
    if gamma == 2.0:
        # == sigmoid(-s)^2, reusing e; reciprocal runs on the EUP slot.
        sig_neg_s = jnp.where(s >= 0.0, e, 1.0) * pl.reciprocal(1.0 + e)
        mod = sig_neg_s * sig_neg_s
    else:
        mod = jnp.exp(-gamma * (jnp.maximum(s, 0.0) + log1pe))
    loss = mod * bce

    if need_mask:
        row_ids = jax.lax.broadcasted_iota(jnp.int32, (tm, tc), 0) + i * tm
        col_ids = jax.lax.broadcasted_iota(jnp.int32, (tm, tc), 1) + j * tc
        valid = (row_ids < rows) & (col_ids < cols)
        loss = jnp.where(valid, loss, 0.0)

    # Fold the tm rows into 8 sublanes (pure VPU adds) and accumulate in VMEM.
    acc_ref[...] += loss.reshape(tm // 8, 8, tc).sum(axis=0)

    # Epilogue for this row tile: fold lane groups to (8,128), write lane-dense
    # partial; the cross-lane/sublane reduce and the mean happen in the wrapper.
    @pl.when(j == pl.num_programs(1) - 1)
    def _():
        a = acc_ref[...]
        r = a[:, 0:128]
        for g in range(1, tc // 128):
            r = r + a[:, g * 128:(g + 1) * 128]
        out_ref[...] = r[None, :, :]


def _choose_tiles(rows, cols, tm=None, tc=None):
    c_pad = _round_up(max(cols, 1), 128)
    if tc is None:
        tc = c_pad if c_pad <= 4096 else 2048
    assert tc % 128 == 0
    n_col = -(-c_pad // tc)
    c_full = n_col * tc
    if tm is None:
        # ~2 MiB of f32 logits per tile, multiple of 8, capped at 2048 rows.
        target_rows = (2 * 1024 * 1024) // (tc * 4)
        tm = max(8, min(2048, (target_rows // 8) * 8))
        tm = min(tm, _round_up(max(rows, 1), 8))
    assert tm % 8 == 0
    n_row = -(-max(rows, 1) // tm)
    r_full = n_row * tm
    return tm, tc, n_row, n_col, r_full, c_full


def focal_loss(logit, target, gamma=GAMMA, *, tm=None, tc=None):
    """Pallas TPU focal loss matching the PyTorch module's forward."""
    assert logit.shape == target.shape
    shape = logit.shape
    if logit.ndim == 2:
        divisor = shape[0]                      # loss.sum(dim=1).mean()
    else:
        divisor = max(1, math.prod(shape))      # plain mean over all elements

    if logit.ndim >= 1:
        logit2 = logit.reshape(-1, shape[-1])
    else:
        logit2 = logit.reshape(1, 1)
    target2 = target.reshape(logit2.shape)
    rows, cols = logit2.shape

    # {0,1} targets are exact in bf16; halves the target HBM stream.
    target2 = target2.astype(jnp.bfloat16)

    tm, tc, n_row, n_col, r_full, c_full = _choose_tiles(rows, cols, tm, tc)
    need_pad = (r_full != rows) or (c_full != cols)
    if need_pad:
        logit2 = jnp.pad(logit2, ((0, r_full - rows), (0, c_full - cols)))
        target2 = jnp.pad(target2, ((0, r_full - rows), (0, c_full - cols)))

    kernel = functools.partial(
        _focal_loss_kernel, gamma=float(gamma), tm=tm, tc=tc,
        rows=rows, cols=cols, need_mask=need_pad)

    # Explicit VMEM budget: double-buffered input tiles + accumulator + slack.
    tile_pair = tm * tc * (logit2.dtype.itemsize + target2.dtype.itemsize)
    vmem_limit = int(min(48 * 2**20, max(32 * 2**20, 3 * tile_pair + 2 * 2**20)))

    partials = pl.pallas_call(
        kernel,
        out_shape=jax.ShapeDtypeStruct((n_row, 8, 128), jnp.float32),
        grid_spec=pltpu.PrefetchScalarGridSpec(
            num_scalar_prefetch=0,
            grid=(n_row, n_col),
            in_specs=[
                pl.BlockSpec((tm, tc), lambda i, j: (i, j)),
                pl.BlockSpec((tm, tc), lambda i, j: (i, j)),
            ],
            out_specs=pl.BlockSpec((1, 8, 128), lambda i, j: (i, 0, 0)),
            scratch_shapes=[pltpu.VMEM((8, tc), jnp.float32)],
        ),
        compiler_params=pltpu.CompilerParams(
            dimension_semantics=("parallel", "arbitrary"),
            vmem_limit_bytes=vmem_limit,
        ),
    )(logit2, target2)

    return jnp.sum(partials) / jnp.float32(divisor)


def focal_loss_ref(logit, target, gamma=GAMMA):
    """Pure-JAX reference mirroring the PyTorch module."""
    t = target.astype(jnp.float32)
    x = logit.astype(jnp.float32)
    max_val = jnp.maximum(-x, 0.0)
    loss = x - x * t + max_val + jnp.log(jnp.exp(-max_val) + jnp.exp(-x - max_val))
    invprobs = jax.nn.log_sigmoid(-x * (t * 2.0 - 1.0))
    loss = jnp.exp(invprobs * gamma) * loss
    if loss.ndim == 2:
        loss = loss.sum(axis=1)
    return loss.mean()


if __name__ == "__main__":
    key = jax.random.PRNGKey(0)
    k1, k2, k3, k4 = jax.random.split(key, 4)

    # Case 1: small 2D, auto tiling (single tile).
    N, C = 16, 256
    logit = jax.random.normal(k1, (N, C), dtype=jnp.float32) * 2.0
    target = jax.random.bernoulli(k2, p=0.3, shape=(N, C)).astype(jnp.float32)
    out = jax.block_until_ready(focal_loss(logit, target))
    ref = focal_loss_ref(logit, target)
    assert jnp.allclose(out, ref, rtol=1e-4, atol=1e-4), (out, ref)

    # Case 2: non-aligned 2D with forced small tiles — exercises the 2D grid,
    # cross-class-tile accumulation, padding + masking.
    N2, C2 = 24, 300
    logit2 = jax.random.normal(k3, (N2, C2), dtype=jnp.float32) * 3.0
    target2 = jax.random.bernoulli(k4, p=0.5, shape=(N2, C2)).astype(jnp.float32)
    out2 = jax.block_until_ready(focal_loss(logit2, target2, tm=8, tc=128))
    ref2 = focal_loss_ref(logit2, target2)
    assert jnp.allclose(out2, ref2, rtol=1e-4, atol=1e-4), (out2, ref2)

    # Case 3: non-2D input (module's plain elementwise-mean branch).
    logit3 = jax.random.normal(k1, (2, 4, 16), dtype=jnp.float32)
    target3 = jax.random.bernoulli(k2, p=0.4, shape=(2, 4, 16)).astype(jnp.float32)
    out3 = jax.block_until_ready(focal_loss(logit3, target3))
    ref3 = focal_loss_ref(logit3, target3)
    assert jnp.allclose(out3, ref3, rtol=1e-4, atol=1e-4), (out3, ref3)

    print("KERNEL_OK")
</pallas_src>

<mosaic_0001>
module attributes {stable_mosaic.version = 11 : i64} {
  func.func @_focal_loss_kernel(%arg0: i32, %arg1: i32, %arg2: memref<16x256xf32, #tpu.memory_space<vmem>>, %arg3: memref<16x256xbf16, #tpu.memory_space<vmem>>, %arg4: memref<1x8x128xf32, #tpu.memory_space<vmem>>, %arg5: memref<8x256xf32, #tpu.memory_space<vmem>>) attributes {dimension_semantics = [#tpu.dimension_semantics<parallel>, #tpu.dimension_semantics<arbitrary>], iteration_bounds = array<i64: 1, 1>, scalar_prefetch = 0 : i64, scratch_operands = 1 : i64, tpu.core_type = #tpu.core_type<tc>, window_params = [{transform_indices = @transform_0, window_bounds = array<i64: 16, 256>}, {transform_indices = @transform_1, window_bounds = array<i64: 16, 256>}, {transform_indices = @transform_2, window_bounds = array<i64: 1, 8, 128>}]} {
    %c0_i32 = arith.constant 0 : i32
    %0 = arith.cmpi eq, %arg1, %c0_i32 : i32
    %1 = arith.extui %0 : i1 to i32
    %c0_i32_0 = arith.constant 0 : i32
    %2 = arith.cmpi ne, %1, %c0_i32_0 : i32
    scf.if %2 {
      %cst_19 = arith.constant 0.000000e+00 : f32
      %44 = vector.broadcast %cst_19 : f32 to vector<8x256xf32>
      %c0_20 = arith.constant 0 : index
      %c0_21 = arith.constant 0 : index
      %45 = vector.load %arg5[%c0_20, %c0_21] : memref<8x256xf32, #tpu.memory_space<vmem>>, vector<8x256xf32>
      tpu.vector_store %arg5[%c0_20, %c0_21], %44 {strides = array<i32>} : memref<8x256xf32, #tpu.memory_space<vmem>>, vector<8x256xf32>,
    } else {
    }
    %c0 = arith.constant 0 : index
    %c0_1 = arith.constant 0 : index
    %3 = vector.load %arg2[%c0, %c0_1] : memref<16x256xf32, #tpu.memory_space<vmem>>, vector<16x256xf32>
    %c0_2 = arith.constant 0 : index
    %c0_3 = arith.constant 0 : index
    %4 = vector.load %arg3[%c0_2, %c0_3] : memref<16x256xbf16, #tpu.memory_space<vmem>>, vector<16x256xbf16>
    %5 = arith.extf %4 : vector<16x256xbf16> to vector<16x256xf32>
    %cst = arith.constant 2.000000e+00 : f32
    %6 = vector.broadcast %cst : f32 to vector<16x256xf32>
    %7 = arith.mulf %5, %6 : vector<16x256xf32>
    %cst_4 = arith.constant 1.000000e+00 : f32
    %8 = vector.broadcast %cst_4 : f32 to vector<16x256xf32>
    %9 = arith.subf %7, %8 : vector<16x256xf32>
    %10 = arith.mulf %3, %9 : vector<16x256xf32>
    %11 = math.absf %3 : vector<16x256xf32>
    %cst_5 = arith.constant 0.000000e+00 : f32
    %12 = vector.broadcast %cst_5 : f32 to vector<16x256xf32>
    %13 = arith.subf %12, %11 : vector<16x256xf32>
    %14 = math.exp %13 : vector<16x256xf32>
    %cst_6 = arith.constant 1.000000e+00 : f32
    %15 = vector.broadcast %cst_6 : f32 to vector<16x256xf32>
    %16 = arith.addf %15, %14 : vector<16x256xf32>
    %17 = math.log %16 : vector<16x256xf32>
    %18 = arith.mulf %3, %5 : vector<16x256xf32>
    %19 = arith.subf %3, %18 : vector<16x256xf32>
    %cst_7 = arith.constant 0.000000e+00 : f32
    %20 = vector.broadcast %cst_7 : f32 to vector<16x256xf32>
    %21 = arith.subf %20, %3 : vector<16x256xf32>
    %cst_8 = arith.constant 0.000000e+00 : f32
    %22 = vector.broadcast %cst_8 : f32 to vector<16x256xf32>
    %23 = arith.maximumf %21, %22 : vector<16x256xf32>
    %24 = arith.addf %19, %23 : vector<16x256xf32>
    %25 = arith.addf %24, %17 : vector<16x256xf32>
    %cst_9 = arith.constant 0.000000e+00 : f32
    %26 = vector.broadcast %cst_9 : f32 to vector<16x256xf32>
    %27 = arith.cmpf oge, %10, %26 : vector<16x256xf32>
    %cst_10 = arith.constant 1.000000e+00 : f32
    %28 = vector.broadcast %cst_10 : f32 to vector<16x256xf32>
    %29 = arith.select %27, %14, %28 : vector<16x256xi1>, vector<16x256xf32>
    %cst_11 = arith.constant 1.000000e+00 : f32
    %30 = vector.broadcast %cst_11 : f32 to vector<16x256xf32>
    %31 = arith.addf %30, %14 : vector<16x256xf32>
    %32 = tpu.reciprocal %31 : vector<16x256xf32> -> vector<16x256xf32>
    %33 = arith.mulf %29, %32 : vector<16x256xf32>
    %34 = arith.mulf %33, %33 : vector<16x256xf32>
    %35 = arith.mulf %34, %25 : vector<16x256xf32>
    %c0_12 = arith.constant 0 : index
    %c0_13 = arith.constant 0 : index
    %36 = vector.load %arg5[%c0_12, %c0_13] : memref<8x256xf32, #tpu.memory_space<vmem>>, vector<8x256xf32>
    %37 = vector.shape_cast %35 : vector<16x256xf32> to vector<2x8x256xf32>
    %cst_14 = arith.constant dense<0.000000e+00> : vector<8x256xf32>
    %38 = vector.multi_reduction <add>, %37, %cst_14 [0] : vector<2x8x256xf32> to vector<8x256xf32>
    %39 = arith.addf %36, %38 : vector<8x256xf32>
    %c0_15 = arith.constant 0 : index
    %c0_16 = arith.constant 0 : index
    %40 = vector.load %arg5[%c0_15, %c0_16] : memref<8x256xf32, #tpu.memory_space<vmem>>, vector<8x256xf32>
    tpu.vector_store %arg5[%c0_15, %c0_16], %39 {strides = array<i32>} : memref<8x256xf32, #tpu.memory_space<vmem>>, vector<8x256xf32>,
    %c0_i32_17 = arith.constant 0 : i32
    %41 = arith.cmpi eq, %arg1, %c0_i32_17 : i32
    %42 = arith.extui %41 : i1 to i32
    %c0_i32_18 = arith.constant 0 : i32
    %43 = arith.cmpi ne, %42, %c0_i32_18 : i32
    scf.if %43 {
      %c0_19 = arith.constant 0 : index
      %c0_20 = arith.constant 0 : index
      %44 = vector.load %arg5[%c0_19, %c0_20] : memref<8x256xf32, #tpu.memory_space<vmem>>, vector<8x256xf32>
      %45 = vector.extract_strided_slice %44 {offsets = [0, 0], sizes = [8, 128], strides = [1, 1]} : vector<8x256xf32> to vector<8x128xf32>
      %46 = vector.extract_strided_slice %44 {offsets = [0, 128], sizes = [8, 128], strides = [1, 1]} : vector<8x256xf32> to vector<8x128xf32>
      %47 = arith.addf %45, %46 : vector<8x128xf32>
      %48 = vector.shape_cast %47 : vector<8x128xf32> to vector<1x8x128xf32>
      %c0_21 = arith.constant 0 : index
      %c0_22 = arith.constant 0 : index
      %c0_23 = arith.constant 0 : index
      %49 = vector.load %arg4[%c0_21, %c0_22, %c0_23] : memref<1x8x128xf32, #tpu.memory_space<vmem>>, vector<1x8x128xf32>
      tpu.vector_store %arg4[%c0_21, %c0_22, %c0_23], %48 {strides = array<i32>} : memref<1x8x128xf32, #tpu.memory_space<vmem>>, vector<1x8x128xf32>,
    } else {
    }
    return
  }
  func.func @transform_0(%arg0: i32, %arg1: i32) -> (i32, i32) {
    %c0_i32 = arith.constant 0 : i32
    return %arg0, %arg1 : i32, i32
  }
  func.func @transform_1(%arg0: i32, %arg1: i32) -> (i32, i32) {
    %c0_i32 = arith.constant 0 : i32
    return %arg0, %arg1 : i32, i32
  }
  func.func @transform_2(%arg0: i32, %arg1: i32) -> (i32, i32, i32) {
    %c0_i32 = arith.constant 0 : i32
    %c0_i32_0 = arith.constant 0 : i32
    %c0_i32_1 = arith.constant 0 : i32
    return %arg0, %c0_i32, %c0_i32_0 : i32, i32, i32
  }
}

</mosaic_0001>

<llo_original>
// kernel: tpu_custom_call.1
$region0: #{tpu_custom_call.1}
  #allocation0 [shape = 'u32[]', space=smem, size = 0x4, offset = 0x4, fixed_abs, tag = 'smem constant byte address 0x4 - core index']
  #allocation1 [shape = 'u32[144,128]{1,0:T(1,128)}', space=vmem, size = 0x12000, scoped, tag = 'internal scratch']
  #allocation2 [shape = 'f32[8,256]{1,0:T(8,128)}', space=vmem, size = 0x2000, scoped, tag = 'scratch operand']
  %s0 = inlined_call_operand.hbm [shape: f32[16,256], index: 0, kind: input, shape index: {}]
  %s1 = inlined_call_operand.hbm [shape: bf16[16,256], index: 1, kind: input, shape index: {}]
  %s2 = inlined_call_operand.hbm [shape: f32[1,8,128], index: 2, kind: output, shape index: {}]
  %s3 = sld [smem:[#allocation0]]
  $region34: #{tpu_custom_call.1} parent=0
    _
  %s5 = ssub.s32 1, %s3
  %s6 = scalar_select 0, %s5, %s3
  $region1: #{tpu_custom_call.1} parent=0
    #allocation3 [shape = 'u8[16384]{0}', space=vmem, size = 0x4000, scoped, tag = 'input window, operand 0, single buffered']
    #allocation4 [shape = 's32[1]{0}', space=sflag, size = 0x4, scoped, tag = 'scoped memory for tpu_custom_call.1']
    #allocation5 [shape = 's32[1]{0}', space=sflag, size = 0x4, scoped, tag = 'scoped memory for tpu_custom_call.1']
    #allocation6 [shape = 'u8[8192]{0}', space=vmem, size = 0x2000, scoped, tag = 'input window, operand 1, single buffered']
    #allocation7 [shape = 's32[1]{0}', space=sflag, size = 0x4, scoped, tag = 'scoped memory for tpu_custom_call.1']
    #allocation8 [shape = 'u8[4096]{0}', space=vmem, size = 0x1000, scoped, tag = 'output window, operand 0, single buffered']
    %7 = vsyncpa [#allocation4], 0
    %8 = vsyncpa [#allocation7], 0
    %9 = vsyncpa [#allocation5], 0
    // Predicated region
    $region2: #{tpu_custom_call.1} parent=1 // pred_check
      _
    $region3: #{tpu_custom_call.1} parent=1 // pred_check_branch
      %11 = sbr.rel (0) target = $region5
    $region4: #{tpu_custom_call.1} parent=1 // pred_region
      %s13 = ssub.s32 512, 512
      %14 = vsyncadd [#allocation4], %s13
      %s15 = sshll.u32 [#allocation3], 4
      %s16 = int_to_ptr.vmem [resolvable:$true] %s15
      %21 = dma.hbm_to_vmem [thread:$0]  %s0, 512, %s16, [#allocation4], 256, 256, 16
    $region5: #{tpu_custom_call.1} parent=1 // pred_fallthru
      _
    // Predicated region
    $region6: #{tpu_custom_call.1} parent=1 // pred_check
      _
    $region7: #{tpu_custom_call.1} parent=1 // pred_check_branch
      %23 = sbr.rel (0) target = $region9
    $region8: #{tpu_custom_call.1} parent=1 // pred_region
      %s25 = ssub.s32 256, 256
      %26 = vsyncadd [#allocation7], %s25
      %s27 = sshll.u32 [#allocation6], 4
      %s28 = int_to_ptr.vmem [resolvable:$true] %s27
      %33 = dma.hbm_to_vmem [thread:$0]  %s1, 256, %s28, [#allocation7], 128, 128, 8
    $region9: #{tpu_custom_call.1} parent=1 // pred_fallthru
      _
    // Predicated region
    $region10: #{tpu_custom_call.1} parent=1 // pred_check
      _
    $region11: #{tpu_custom_call.1} parent=1 // pred_check_branch
      %35 = sbr.rel (0) target = $region13
    $region12: #{tpu_custom_call.1} parent=1 // pred_region
      %36 = dma.done [#allocation4], 512
    $region13: #{tpu_custom_call.1} parent=1 // pred_fallthru
      _
    // Predicated region
    $region14: #{tpu_custom_call.1} parent=1 // pred_check
      _
    $region15: #{tpu_custom_call.1} parent=1 // pred_check_branch
      %38 = sbr.rel (0) target = $region17
    $region16: #{tpu_custom_call.1} parent=1 // pred_region
      %39 = dma.done [#allocation7], 256
    $region17: #{tpu_custom_call.1} parent=1 // pred_fallthru
      _
    %p40 = scmp.eq.s32.totalorder 0, 0
    // Predicated region
    $region18: #{tpu_custom_call.1} parent=1 // pred_check
      %p41 = pneg %p40
    $region19: #{tpu_custom_call.1} parent=1 // pred_check_branch
      %43 = sbr.rel (%p41) target = $region21
    $region20: #{tpu_custom_call.1} parent=1 // pred_region
      %44 = vst [vmem:[#allocation2] sm:$0xff] 0.0
      %45 = vst [vmem:[#allocation2 + $0x8] sm:$0xff] 0.0
    $region21: #{tpu_custom_call.1} parent=1 // pred_fallthru
      _
    %v46 = vld [vmem:[#allocation3] sm:$0xff]
    %v47 = vld [vmem:[#allocation3 + $0x8] sm:$0xff]
    %v48 = vld [vmem:[#allocation3 + $0x10] sm:$0xff]
    %v49 = vld [vmem:[#allocation3 + $0x18] sm:$0xff]
    %v50 = vld [vmem:[#allocation6] sm:$0xff]
    %v51 = vld [vmem:[#allocation6 + $0x8] sm:$0xff]
    %v52 = vunpack.c.l.bf16 %v50
    %v53 = vunpack.c.h.bf16 %v50
    %v54 = vunpack.c.l.bf16 %v51
    %v55 = vunpack.c.h.bf16 %v51
    %v56 = vmul.f32 %v52, 2.0
    %v57 = vmul.f32 %v53, 2.0
    %v58 = vmul.f32 %v54, 2.0
    %v59 = vmul.f32 %v55, 2.0
    %v60 = vsub.f32 %v56, 1.0
    %v61 = vsub.f32 %v57, 1.0
    %v62 = vsub.f32 %v58, 1.0
    %v63 = vsub.f32 %v59, 1.0
    %v64 = vmul.f32 %v46, %v60
    %v65 = vmul.f32 %v47, %v61
    %v66 = vmul.f32 %v48, %v62
    %v67 = vmul.f32 %v49, %v63
    %v68 = vand.u32 2147483647, %v46
    %v69 = vand.u32 2147483647, %v47
    %v70 = vand.u32 2147483647, %v48
    %v71 = vand.u32 2147483647, %v49
    %v72 = vsub.f32 0.0, %v68
    %v73 = vsub.f32 0.0, %v69
    %v74 = vsub.f32 0.0, %v70
    %v75 = vsub.f32 0.0, %v71
    %v76 = vmul.f32 %v72, 1.442695
    %v77 = vpow.pop %v76
    %v78 = vmul.f32 %v73, 1.442695
    %v79 = vpow.pop %v78
    %v80 = vmul.f32 %v74, 1.442695
    %v81 = vpow.pop %v80
    %v82 = vmul.f32 %v75, 1.442695
    %v83 = vpow.pop %v82
    %v84 = vadd.f32 %v77, 1.0
    %v85 = vadd.f32 %v79, 1.0
    %v86 = vadd.f32 %v81, 1.0
    %v87 = vadd.f32 %v83, 1.0
    %v88 = vlog2.pop %v84
    %v89 = vmul.f32 %v88, 0.6931472
    %v90 = vlog2.pop %v85
    %v91 = vmul.f32 %v90, 0.6931472
    %v92 = vlog2.pop %v86
    %v93 = vmul.f32 %v92, 0.6931472
    %v94 = vlog2.pop %v87
    %v95 = vmul.f32 %v94, 0.6931472
    %v96 = vmul.f32 %v46, %v52
    %v97 = vmul.f32 %v47, %v53
    %v98 = vmul.f32 %v48, %v54
    %v99 = vmul.f32 %v49, %v55
    %v100 = vsub.f32 %v46, %v96
    %v101 = vsub.f32 %v47, %v97
    %v102 = vsub.f32 %v48, %v98
    %v103 = vsub.f32 %v49, %v99
    %v104 = vsub.f32 0.0, %v46
    %v105 = vsub.f32 0.0, %v47
    %v106 = vsub.f32 0.0, %v48
    %v107 = vsub.f32 0.0, %v49
    %v108 = vmax.f32 %v104, 0.0
    %v109 = vmax.f32 %v105, 0.0
    %v110 = vmax.f32 %v106, 0.0
    %v111 = vmax.f32 %v107, 0.0
    %v112 = vadd.f32 %v100, %v108
    %v113 = vadd.f32 %v101, %v109
    %v114 = vadd.f32 %v102, %v110
    %v115 = vadd.f32 %v103, %v111
    %v116 = vadd.f32 %v112, %v89
    %v117 = vadd.f32 %v113, %v91
    %v118 = vadd.f32 %v114, %v93
    %v119 = vadd.f32 %v115, %v95
    %vm120 = vcmp.ge.f32.partialorder %v64, 0.0
    %vm121 = vcmp.ge.f32.partialorder %v65, 0.0
    %vm122 = vcmp.ge.f32.partialorder %v66, 0.0
    %vm123 = vcmp.ge.f32.partialorder %v67, 0.0
    %v124 = vsel %vm120, %v77, 1.0
    %v125 = vsel %vm121, %v79, 1.0
    %v126 = vsel %vm122, %v81, 1.0
    %v127 = vsel %vm123, %v83, 1.0
    %v128 = vrcp.pop %v84
    %v129 = vrcp.pop %v85
    %v130 = vrcp.pop %v86
    %v131 = vrcp.pop %v87
    %v132 = vmul.f32 %v124, %v128
    %v133 = vmul.f32 %v125, %v129
    %v134 = vmul.f32 %v126, %v130
    %v135 = vmul.f32 %v127, %v131
    %v136 = vmul.f32 %v132, %v132
    %v137 = vmul.f32 %v133, %v133
    %v138 = vmul.f32 %v134, %v134
    %v139 = vmul.f32 %v135, %v135
    %v140 = vmul.f32 %v136, %v116
    %v141 = vmul.f32 %v137, %v117
    %v142 = vmul.f32 %v138, %v118
    %v143 = vmul.f32 %v139, %v119
    %v144 = vld [vmem:[#allocation2] sm:$0xff]
    %v145 = vld [vmem:[#allocation2 + $0x8] sm:$0xff]
    %v146 = vadd.f32 %v140, %v142
    %v147 = vadd.f32 %v141, %v143
    %v148 = vadd.f32 %v144, %v146
    %v149 = vadd.f32 %v145, %v147
    %150 = vst [vmem:[#allocation2] sm:$0xff] %v148
    %151 = vst [vmem:[#allocation2 + $0x8] sm:$0xff] %v149
    // Predicated region
    $region22: #{tpu_custom_call.1} parent=1 // pred_check
      %p152 = pneg %p40
    $region23: #{tpu_custom_call.1} parent=1 // pred_check_branch
      %154 = sbr.rel (%p152) target = $region25
    $region24: #{tpu_custom_call.1} parent=1 // pred_region
      %v155 = vld [vmem:[#allocation2] sm:$0xff]
      %v156 = vld [vmem:[#allocation2 + $0x8] sm:$0xff]
      %v157 = vadd.f32 %v155, %v156
      %158 = vst [vmem:[#allocation8] sm:$0xff] %v157
    $region25: #{tpu_custom_call.1} parent=1 // pred_fallthru
      _
    // Predicated region
    $region26: #{tpu_custom_call.1} parent=1 // pred_check
      _
    $region27: #{tpu_custom_call.1} parent=1 // pred_check_branch
      %160 = sbr.rel (0) target = $region29
    $region28: #{tpu_custom_call.1} parent=1 // pred_region
      %s162 = ssub.s32 128, 128
      %163 = vsyncadd [#allocation5], %s162
      %s165 = sshll.u32 [#allocation8], 4
      %s166 = int_to_ptr.vmem [resolvable:$true] %s165
      %168 = dma.vmem_to_hbm [thread:$0]  %s166, 128, %s2, [#allocation5]
    $region29: #{tpu_custom_call.1} parent=1 // pred_fallthru
      _
    // Predicated region
    $region30: #{tpu_custom_call.1} parent=1 // pred_check
      _
    $region31: #{tpu_custom_call.1} parent=1 // pred_check_branch
      %170 = sbr.rel (0) target = $region33
    $region32: #{tpu_custom_call.1} parent=1 // pred_region
      %171 = dma.done [#allocation5], 128
    $region33: #{tpu_custom_call.1} parent=1 // pred_fallthru
      _
    %172 = vsyncpa [#allocation4], 1
    %173 = vsyncpa [#allocation7], 1
    %174 = vsyncpa [#allocation5], 1

</llo_original>
